<compile_context>
chip_gen: v6e
topology: v6e:2x2x1
jax: 0.10.0
libtpu: 0.0.40
codegen_flags: <defaults>
</compile_context>

<pallas_src>
import jax
import jax.numpy as jnp
from jax.experimental import pallas as pl
from jax.experimental.pallas import tpu as pltpu

EPS = 1e-5
LANES = 128


def _round_up(n, m):
    return ((n + m - 1) // m) * m


def predictor_kernel(s_ref, a_ref, w1s_ref, w1a_ref, w2_ref, gb_ref, o_ref):
    # s_ref: (B, H)   a_ref: (B, A)
    # w1s:   (H, Hp)  w1a:   (A, Hp)   w2: (Hp, Hp)
    # gb:    (8, Hp)  rows = [gamma1, beta1, gamma2, beta2, 0...]
    s = s_ref[...]
    a = a_ref[...]
    gb = gb_ref[...]
    inv_n = 1.0 / s.shape[0]

    # ---- fc1 (biases omitted: cancelled by training-mode BN mean subtraction) ----
    h = (jnp.dot(s, w1s_ref[...], preferred_element_type=jnp.float32)
         + jnp.dot(a, w1a_ref[...], preferred_element_type=jnp.float32))

    # ---- bn1 + relu (fused affine, one-pass variance) ----
    mean = jnp.sum(h, axis=0, keepdims=True) * inv_n
    var = jnp.sum(h * h, axis=0, keepdims=True) * inv_n - mean * mean
    scale = gb[0:1, :] * jax.lax.rsqrt(var + EPS)
    shift = gb[1:2, :] - mean * scale
    h = jnp.maximum(h * scale + shift, 0.0)

    # ---- fc2 ----
    h = jnp.dot(h, w2_ref[...], preferred_element_type=jnp.float32)

    # ---- bn2 + relu ----
    mean = jnp.sum(h, axis=0, keepdims=True) * inv_n
    var = jnp.sum(h * h, axis=0, keepdims=True) * inv_n - mean * mean
    scale = gb[2:3, :] * jax.lax.rsqrt(var + EPS)
    shift = gb[3:4, :] - mean * scale
    o_ref[...] = jnp.maximum(h * scale + shift, 0.0).astype(o_ref.dtype)


def init_params(key, hidden_dim, action_dim):
    """Logical (PyTorch-equivalent) parameters. Weights stored transposed, i.e.
    w1: (hidden_dim + action_dim, hidden_dim) so the forward does x @ w1."""
    in_dim = hidden_dim + action_dim
    k1, k2, k3, k4 = jax.random.split(key, 4)
    bound1 = 1.0 / jnp.sqrt(in_dim)
    bound2 = 1.0 / jnp.sqrt(hidden_dim)
    return {
        "w1": jax.random.uniform(k1, (in_dim, hidden_dim), jnp.float32, -bound1, bound1),
        "b1": jax.random.uniform(k2, (hidden_dim,), jnp.float32, -bound1, bound1),
        "w2": jax.random.uniform(k3, (hidden_dim, hidden_dim), jnp.float32, -bound2, bound2),
        "b2": jax.random.uniform(k4, (hidden_dim,), jnp.float32, -bound2, bound2),
        "gamma1": jnp.ones((hidden_dim,), jnp.float32),
        "beta1": jnp.zeros((hidden_dim,), jnp.float32),
        "gamma2": jnp.ones((hidden_dim,), jnp.float32),
        "beta2": jnp.zeros((hidden_dim,), jnp.float32),
    }


def prepare_kernel_params(params, hidden_dim, action_dim):
    """One-time repack of the logical params into the lane-dense kernel layout
    (done once, off the per-call hot path)."""
    hp = _round_up(hidden_dim, LANES)
    pad_f = hp - hidden_dim

    w1 = params["w1"]                                   # (H + A, H)
    w1s = jnp.pad(w1[:hidden_dim], ((0, 0), (0, pad_f)))        # (H, Hp)
    w1a = jnp.pad(w1[hidden_dim:], ((0, 0), (0, pad_f)))        # (A, Hp)
    w2 = jnp.pad(params["w2"], ((0, pad_f), (0, pad_f)))        # (Hp, Hp)

    gb = jnp.zeros((8, hp), jnp.float32)
    gb = gb.at[0, :hidden_dim].set(params["gamma1"])
    gb = gb.at[1, :hidden_dim].set(params["beta1"])
    gb = gb.at[2, :hidden_dim].set(params["gamma2"])
    gb = gb.at[3, :hidden_dim].set(params["beta2"])
    # Linear biases b1/b2 are intentionally not packed: BN in training mode
    # subtracts the batch mean, which cancels any per-feature constant exactly.
    return {"w1s": w1s, "w1a": w1a, "w2": w2, "gb": gb, "hidden_dim": hidden_dim}


def predictor_forward(state, action, kparams):
    """state: (B, H) or (N, B, H); action: (B, A) or (N, B, A) -> matching (…, B, H)."""
    hidden_dim = kparams["hidden_dim"]
    squeeze = state.ndim == 2
    if squeeze:
        state = state[None]
        action = action[None]
    n, b, h_in = state.shape
    a_dim = action.shape[-1]
    hp = kparams["w2"].shape[0]

    out = pl.pallas_call(
        predictor_kernel,
        out_shape=jax.ShapeDtypeStruct((n, b, hp), jnp.float32),
        grid=(n,),
        in_specs=[
            pl.BlockSpec((None, b, h_in), lambda i: (i, 0, 0)),   # state
            pl.BlockSpec((None, b, a_dim), lambda i: (i, 0, 0)),  # action
            pl.BlockSpec((h_in, hp), lambda i: (0, 0)),           # w1 (state part)
            pl.BlockSpec((a_dim, hp), lambda i: (0, 0)),          # w1 (action part)
            pl.BlockSpec((hp, hp), lambda i: (0, 0)),             # w2
            pl.BlockSpec((8, hp), lambda i: (0, 0)),              # packed gamma/beta
        ],
        out_specs=pl.BlockSpec((None, b, hp), lambda i: (i, 0, 0)),
        compiler_params=pltpu.CompilerParams(
            dimension_semantics=("parallel",)),   # shards over v7x's 2 TCs when n > 1
    )(state, action, kparams["w1s"], kparams["w1a"], kparams["w2"], kparams["gb"])

    out = out[..., :hidden_dim]
    if squeeze:
        out = out[0]
    return out


def reference_forward(state, action, params):
    """Pure-JAX reference matching the PyTorch module (training-mode BN)."""
    x = jnp.concatenate([state, action], axis=-1)
    h = x @ params["w1"] + params["b1"]
    m = h.mean(0, keepdims=True)
    v = ((h - m) ** 2).mean(0, keepdims=True)
    h = (h - m) / jnp.sqrt(v + EPS) * params["gamma1"] + params["beta1"]
    h = jnp.maximum(h, 0.0)
    h = h @ params["w2"] + params["b2"]
    m = h.mean(0, keepdims=True)
    v = ((h - m) ** 2).mean(0, keepdims=True)
    h = (h - m) / jnp.sqrt(v + EPS) * params["gamma2"] + params["beta2"]
    return jnp.maximum(h, 0.0)


if __name__ == "__main__":
    hidden_dim, action_dim, batch = 32, 8, 8
    key = jax.random.PRNGKey(0)
    kp, ks, ka = jax.random.split(key, 3)

    params = init_params(kp, hidden_dim, action_dim)
    kparams = prepare_kernel_params(params, hidden_dim, action_dim)

    # --- single batch (matches the PyTorch forward signature) ---
    state = jax.random.normal(ks, (batch, hidden_dim), jnp.float32)
    action = jax.random.normal(ka, (batch, action_dim), jnp.float32)

    out = jax.block_until_ready(predictor_forward(state, action, kparams))
    ref = reference_forward(state, action, params)
    assert out.shape == (batch, hidden_dim)
    assert jnp.allclose(out, ref, atol=1e-4, rtol=1e-4), "single-batch mismatch"

    # --- many independent batches folded into one gridded call ---
    n_eval = 4
    states = jax.random.normal(ks, (n_eval, batch, hidden_dim), jnp.float32)
    actions = jax.random.normal(ka, (n_eval, batch, action_dim), jnp.float32)
    outs = jax.block_until_ready(predictor_forward(states, actions, kparams))
    refs = jax.vmap(lambda s, a: reference_forward(s, a, params))(states, actions)
    assert outs.shape == (n_eval, batch, hidden_dim)
    assert jnp.allclose(outs, refs, atol=1e-4, rtol=1e-4), "batched mismatch"

    print("KERNEL_OK")
</pallas_src>

<mosaic_0001>
module attributes {stable_mosaic.version = 11 : i64} {
  func.func @predictor_kernel(%arg0: i32, %arg1: memref<1x8x32xf32, #tpu.memory_space<vmem>>, %arg2: memref<1x8x8xf32, #tpu.memory_space<vmem>>, %arg3: memref<32x128xf32, #tpu.memory_space<vmem>>, %arg4: memref<8x128xf32, #tpu.memory_space<vmem>>, %arg5: memref<128x128xf32, #tpu.memory_space<vmem>>, %arg6: memref<8x128xf32, #tpu.memory_space<vmem>>, %arg7: memref<1x8x128xf32, #tpu.memory_space<vmem>>) attributes {dimension_semantics = [#tpu.dimension_semantics<parallel>], iteration_bounds = array<i64: 1>, scalar_prefetch = 0 : i64, scratch_operands = 0 : i64, tpu.core_type = #tpu.core_type<tc>, window_params = [{transform_indices = @transform_0, window_bounds = array<i64: 1, 8, 32>}, {transform_indices = @transform_1, window_bounds = array<i64: 1, 8, 8>}, {pipeline_mode = #tpu.pipeline_mode<synchronous>, transform_indices = @transform_2, window_bounds = array<i64: 32, 128>}, {pipeline_mode = #tpu.pipeline_mode<synchronous>, transform_indices = @transform_3, window_bounds = array<i64: 8, 128>}, {pipeline_mode = #tpu.pipeline_mode<synchronous>, transform_indices = @transform_4, window_bounds = array<i64: 128, 128>}, {pipeline_mode = #tpu.pipeline_mode<synchronous>, transform_indices = @transform_5, window_bounds = array<i64: 8, 128>}, {transform_indices = @transform_6, window_bounds = array<i64: 1, 8, 128>}]} {
    %c0 = arith.constant 0 : index
    %c0_0 = arith.constant 0 : index
    %c0_1 = arith.constant 0 : index
    %0 = vector.load %arg1[%c0, %c0_0, %c0_1] : memref<1x8x32xf32, #tpu.memory_space<vmem>>, vector<1x8x32xf32>
    %1 = vector.shape_cast %0 : vector<1x8x32xf32> to vector<8x32xf32>
    %c0_2 = arith.constant 0 : index
    %c0_3 = arith.constant 0 : index
    %c0_4 = arith.constant 0 : index
    %2 = vector.load %arg2[%c0_2, %c0_3, %c0_4] : memref<1x8x8xf32, #tpu.memory_space<vmem>>, vector<1x8x8xf32>
    %3 = vector.shape_cast %2 : vector<1x8x8xf32> to vector<8x8xf32>
    %c0_5 = arith.constant 0 : index
    %c0_6 = arith.constant 0 : index
    %4 = vector.load %arg6[%c0_5, %c0_6] : memref<8x128xf32, #tpu.memory_space<vmem>>, vector<8x128xf32>
    %c0_7 = arith.constant 0 : index
    %c0_8 = arith.constant 0 : index
    %5 = vector.load %arg3[%c0_7, %c0_8] : memref<32x128xf32, #tpu.memory_space<vmem>>, vector<32x128xf32>
    %cst = arith.constant dense<0.000000e+00> : vector<8x128xf32>
    %6 = tpu.matmul %1, %5, %cst {dimension_numbers = #tpu.dot_dimension_numbers<[1], [0], [0], [1], [0, 0, 1, 1], [], []>} : vector<8x32xf32>, vector<32x128xf32>, vector<8x128xf32> -> vector<8x128xf32>
    %c0_9 = arith.constant 0 : index
    %c0_10 = arith.constant 0 : index
    %7 = vector.load %arg4[%c0_9, %c0_10] : memref<8x128xf32, #tpu.memory_space<vmem>>, vector<8x128xf32>
    %cst_11 = arith.constant dense<0.000000e+00> : vector<8x128xf32>
    %8 = tpu.matmul %3, %7, %cst_11 {dimension_numbers = #tpu.dot_dimension_numbers<[1], [0], [0], [1], [0, 0, 1, 1], [], []>} : vector<8x8xf32>, vector<8x128xf32>, vector<8x128xf32> -> vector<8x128xf32>
    %9 = arith.addf %6, %8 : vector<8x128xf32>
    %cst_12 = arith.constant dense<0.000000e+00> : vector<128xf32>
    %10 = vector.multi_reduction <add>, %9, %cst_12 [0] : vector<8x128xf32> to vector<128xf32>
    %11 = vector.shape_cast %10 : vector<128xf32> to vector<1x128xf32>
    %cst_13 = arith.constant 1.250000e-01 : f32
    %12 = vector.broadcast %cst_13 : f32 to vector<1x128xf32>
    %13 = arith.mulf %11, %12 : vector<1x128xf32>
    %14 = arith.mulf %9, %9 : vector<8x128xf32>
    %cst_14 = arith.constant dense<0.000000e+00> : vector<128xf32>
    %15 = vector.multi_reduction <add>, %14, %cst_14 [0] : vector<8x128xf32> to vector<128xf32>
    %16 = vector.shape_cast %15 : vector<128xf32> to vector<1x128xf32>
    %cst_15 = arith.constant 1.250000e-01 : f32
    %17 = vector.broadcast %cst_15 : f32 to vector<1x128xf32>
    %18 = arith.mulf %16, %17 : vector<1x128xf32>
    %19 = arith.mulf %13, %13 : vector<1x128xf32>
    %20 = arith.subf %18, %19 : vector<1x128xf32>
    %21 = vector.extract_strided_slice %4 {offsets = [0, 0], sizes = [1, 128], strides = [1, 1]} : vector<8x128xf32> to vector<1x128xf32>
    %cst_16 = arith.constant 9.99999974E-6 : f32
    %22 = vector.broadcast %cst_16 : f32 to vector<1x128xf32>
    %23 = arith.addf %20, %22 : vector<1x128xf32>
    %24 = math.rsqrt %23 : vector<1x128xf32>
    %25 = arith.mulf %21, %24 : vector<1x128xf32>
    %26 = vector.extract_strided_slice %4 {offsets = [1, 0], sizes = [1, 128], strides = [1, 1]} : vector<8x128xf32> to vector<1x128xf32>
    %27 = arith.mulf %13, %25 : vector<1x128xf32>
    %28 = arith.subf %26, %27 : vector<1x128xf32>
    %29 = vector.broadcast %25 : vector<1x128xf32> to vector<8x128xf32>
    %30 = arith.mulf %9, %29 : vector<8x128xf32>
    %31 = vector.broadcast %28 : vector<1x128xf32> to vector<8x128xf32>
    %32 = arith.addf %30, %31 : vector<8x128xf32>
    %cst_17 = arith.constant 0.000000e+00 : f32
    %33 = vector.broadcast %cst_17 : f32 to vector<8x128xf32>
    %34 = arith.maximumf %32, %33 : vector<8x128xf32>
    %c0_18 = arith.constant 0 : index
    %c0_19 = arith.constant 0 : index
    %35 = vector.load %arg5[%c0_18, %c0_19] : memref<128x128xf32, #tpu.memory_space<vmem>>, vector<128x128xf32>
    %cst_20 = arith.constant dense<0.000000e+00> : vector<8x128xf32>
    %36 = tpu.matmul %34, %35, %cst_20 {dimension_numbers = #tpu.dot_dimension_numbers<[1], [0], [0], [1], [0, 0, 1, 1], [], []>} : vector<8x128xf32>, vector<128x128xf32>, vector<8x128xf32> -> vector<8x128xf32>
    %cst_21 = arith.constant dense<0.000000e+00> : vector<128xf32>
    %37 = vector.multi_reduction <add>, %36, %cst_21 [0] : vector<8x128xf32> to vector<128xf32>
    %38 = vector.shape_cast %37 : vector<128xf32> to vector<1x128xf32>
    %cst_22 = arith.constant 1.250000e-01 : f32
    %39 = vector.broadcast %cst_22 : f32 to vector<1x128xf32>
    %40 = arith.mulf %38, %39 : vector<1x128xf32>
    %41 = arith.mulf %36, %36 : vector<8x128xf32>
    %cst_23 = arith.constant dense<0.000000e+00> : vector<128xf32>
    %42 = vector.multi_reduction <add>, %41, %cst_23 [0] : vector<8x128xf32> to vector<128xf32>
    %43 = vector.shape_cast %42 : vector<128xf32> to vector<1x128xf32>
    %cst_24 = arith.constant 1.250000e-01 : f32
    %44 = vector.broadcast %cst_24 : f32 to vector<1x128xf32>
    %45 = arith.mulf %43, %44 : vector<1x128xf32>
    %46 = arith.mulf %40, %40 : vector<1x128xf32>
    %47 = arith.subf %45, %46 : vector<1x128xf32>
    %48 = vector.extract_strided_slice %4 {offsets = [2, 0], sizes = [1, 128], strides = [1, 1]} : vector<8x128xf32> to vector<1x128xf32>
    %cst_25 = arith.constant 9.99999974E-6 : f32
    %49 = vector.broadcast %cst_25 : f32 to vector<1x128xf32>
    %50 = arith.addf %47, %49 : vector<1x128xf32>
    %51 = math.rsqrt %50 : vector<1x128xf32>
    %52 = arith.mulf %48, %51 : vector<1x128xf32>
    %53 = vector.extract_strided_slice %4 {offsets = [3, 0], sizes = [1, 128], strides = [1, 1]} : vector<8x128xf32> to vector<1x128xf32>
    %54 = arith.mulf %40, %52 : vector<1x128xf32>
    %55 = arith.subf %53, %54 : vector<1x128xf32>
    %56 = vector.broadcast %52 : vector<1x128xf32> to vector<8x128xf32>
    %57 = arith.mulf %36, %56 : vector<8x128xf32>
    %58 = vector.broadcast %55 : vector<1x128xf32> to vector<8x128xf32>
    %59 = arith.addf %57, %58 : vector<8x128xf32>
    %cst_26 = arith.constant 0.000000e+00 : f32
    %60 = vector.broadcast %cst_26 : f32 to vector<8x128xf32>
    %61 = arith.maximumf %59, %60 : vector<8x128xf32>
    %c0_27 = arith.constant 0 : index
    %c0_28 = arith.constant 0 : index
    %c0_29 = arith.constant 0 : index
    %62 = vector.load %arg7[%c0_27, %c0_28, %c0_29] : memref<1x8x128xf32, #tpu.memory_space<vmem>>, vector<1x8x128xf32>
    %63 = vector.shape_cast %62 : vector<1x8x128xf32> to vector<8x128xf32>
    %64 = vector.shape_cast %61 : vector<8x128xf32> to vector<1x8x128xf32>
    tpu.vector_store %arg7[%c0_27, %c0_28, %c0_29], %64 {strides = array<i32>} : memref<1x8x128xf32, #tpu.memory_space<vmem>>, vector<1x8x128xf32>,
    return
  }
  func.func @transform_0(%arg0: i32) -> (i32, i32, i32) {
    %c0_i32 = arith.constant 0 : i32
    %c0_i32_0 = arith.constant 0 : i32
    %c0_i32_1 = arith.constant 0 : i32
    return %arg0, %c0_i32, %c0_i32_0 : i32, i32, i32
  }
  func.func @transform_1(%arg0: i32) -> (i32, i32, i32) {
    %c0_i32 = arith.constant 0 : i32
    %c0_i32_0 = arith.constant 0 : i32
    %c0_i32_1 = arith.constant 0 : i32
    return %arg0, %c0_i32, %c0_i32_0 : i32, i32, i32
  }
  func.func @transform_2(%arg0: i32) -> (i32, i32) {
    %c0_i32 = arith.constant 0 : i32
    %c0_i32_0 = arith.constant 0 : i32
    %c0_i32_1 = arith.constant 0 : i32
    return %c0_i32, %c0_i32_0 : i32, i32
  }
  func.func @transform_3(%arg0: i32) -> (i32, i32) {
    %c0_i32 = arith.constant 0 : i32
    %c0_i32_0 = arith.constant 0 : i32
    %c0_i32_1 = arith.constant 0 : i32
    return %c0_i32, %c0_i32_0 : i32, i32
  }
  func.func @transform_4(%arg0: i32) -> (i32, i32) {
    %c0_i32 = arith.constant 0 : i32
    %c0_i32_0 = arith.constant 0 : i32
    %c0_i32_1 = arith.constant 0 : i32
    return %c0_i32, %c0_i32_0 : i32, i32
  }
  func.func @transform_5(%arg0: i32) -> (i32, i32) {
    %c0_i32 = arith.constant 0 : i32
    %c0_i32_0 = arith.constant 0 : i32
    %c0_i32_1 = arith.constant 0 : i32
    return %c0_i32, %c0_i32_0 : i32, i32
  }
  func.func @transform_6(%arg0: i32) -> (i32, i32, i32) {
    %c0_i32 = arith.constant 0 : i32
    %c0_i32_0 = arith.constant 0 : i32
    %c0_i32_1 = arith.constant 0 : i32
    return %arg0, %c0_i32, %c0_i32_0 : i32, i32, i32
  }
}

</mosaic_0001>

<llo_original>
// kernel: tpu_custom_call.1
$region0: #{tpu_custom_call.1}
  #allocation0 [shape = 'u32[]', space=smem, size = 0x4, offset = 0x4, fixed_abs, tag = 'smem constant byte address 0x4 - core index']
  #allocation1 [shape = 'u32[144,128]{1,0:T(1,128)}', space=vmem, size = 0x12000, scoped, tag = 'internal scratch']
  %s0 = inlined_call_operand.hbm [shape: f32[1,8,32], index: 0, kind: input, shape index: {}]
  %s1 = inlined_call_operand.hbm [shape: f32[1,8,8], index: 1, kind: input, shape index: {}]
  %s2 = inlined_call_operand.hbm [shape: f32[32,128], index: 2, kind: input, shape index: {}]
  %s3 = inlined_call_operand.hbm [shape: f32[8,128], index: 3, kind: input, shape index: {}]
  %s4 = inlined_call_operand.hbm [shape: f32[128,128], index: 4, kind: input, shape index: {}]
  %s5 = inlined_call_operand.vmem [shape: f32[8,128], index: 5, kind: input, shape index: {}]
  %s6 = inlined_call_operand.hbm [shape: f32[1,8,128], index: 6, kind: output, shape index: {}]
  %s7 = sld [smem:[#allocation0]]
  $region54: #{tpu_custom_call.1} parent=0
    _
  %s9 = ssub.s32 1, %s7
  %s10 = scalar_select 0, %s9, %s7
  $region1: #{tpu_custom_call.1} parent=0
    #allocation2 [shape = 'u8[4096]{0}', space=vmem, size = 0x1000, scoped, tag = 'input window, operand 0, single buffered']
    #allocation3 [shape = 's32[1]{0}', space=sflag, size = 0x4, scoped, tag = 'scoped memory for tpu_custom_call.1']
    #allocation4 [shape = 's32[1]{0}', space=sflag, size = 0x4, scoped, tag = 'scoped memory for tpu_custom_call.1']
    #allocation5 [shape = 'u8[4096]{0}', space=vmem, size = 0x1000, scoped, tag = 'input window, operand 1, single buffered']
    #allocation6 [shape = 's32[1]{0}', space=sflag, size = 0x4, scoped, tag = 'scoped memory for tpu_custom_call.1']
    #allocation7 [shape = 'u8[16384]{0}', space=vmem, size = 0x4000, scoped, tag = 'input window, operand 2, single buffered']
    #allocation8 [shape = 'u8[4096]{0}', space=vmem, size = 0x1000, scoped, tag = 'input window, operand 3, single buffered']
    #allocation9 [shape = 's32[1]{0}', space=sflag, size = 0x4, scoped, tag = 'scoped memory for tpu_custom_call.1']
    #allocation10 [shape = 'u8[65536]{0}', space=vmem, size = 0x10000, scoped, tag = 'input window, operand 4, single buffered']
    #allocation11 [shape = 'u8[4096]{0}', space=vmem, size = 0x1000, scoped, tag = 'output window, operand 0, single buffered']
    %11 = vsyncpa [#allocation3], 0
    %12 = vsyncpa [#allocation6], 0
    %13 = vsyncpa [#allocation9], 0
    %14 = vsyncpa [#allocation4], 0
    // Predicated region
    $region2: #{tpu_custom_call.1} parent=1 // pred_check
      _
    $region3: #{tpu_custom_call.1} parent=1 // pred_check_branch
      %16 = sbr.rel (0) target = $region5
    $region4: #{tpu_custom_call.1} parent=1 // pred_region
      %s18 = ssub.s32 128, 128
      %19 = vsyncadd [#allocation3], %s18
      %s21 = sshll.u32 [#allocation2], 4
      %s22 = int_to_ptr.vmem [resolvable:$true] %s21
      %24 = dma.hbm_to_vmem [thread:$0]  %s0, 128, %s22, [#allocation3]
    $region5: #{tpu_custom_call.1} parent=1 // pred_fallthru
      _
    // Predicated region
    $region6: #{tpu_custom_call.1} parent=1 // pred_check
      _
    $region7: #{tpu_custom_call.1} parent=1 // pred_check_branch
      %26 = sbr.rel (0) target = $region9
    $region8: #{tpu_custom_call.1} parent=1 // pred_region
      %s28 = ssub.s32 128, 128
      %29 = vsyncadd [#allocation6], %s28
      %s31 = sshll.u32 [#allocation5], 4
      %s32 = int_to_ptr.vmem [resolvable:$true] %s31
      %34 = dma.hbm_to_vmem [thread:$0]  %s1, 128, %s32, [#allocation6]
    $region9: #{tpu_custom_call.1} parent=1 // pred_fallthru
      _
    // Predicated region
    $region10: #{tpu_custom_call.1} parent=1 // pred_check
      _
    $region11: #{tpu_custom_call.1} parent=1 // pred_check_branch
      %36 = sbr.rel (0) target = $region13
    $region12: #{tpu_custom_call.1} parent=1 // pred_region
      %s38 = ssub.s32 512, 512
      %39 = vsyncadd [#allocation6], %s38
      %s40 = sshll.u32 [#allocation7], 4
      %s41 = int_to_ptr.vmem [resolvable:$true] %s40
      %46 = dma.hbm_to_vmem [thread:$0]  %s2, 512, %s41, [#allocation6], 128, 128, 8
    $region13: #{tpu_custom_call.1} parent=1 // pred_fallthru
      _
    // Predicated region
    $region14: #{tpu_custom_call.1} parent=1 // pred_check
      _
    $region15: #{tpu_custom_call.1} parent=1 // pred_check_branch
      %48 = sbr.rel (0) target = $region17
    $region16: #{tpu_custom_call.1} parent=1 // pred_region
      %s50 = ssub.s32 128, 128
      %51 = vsyncadd [#allocation9], %s50
      %s53 = sshll.u32 [#allocation8], 4
      %s54 = int_to_ptr.vmem [resolvable:$true] %s53
      %56 = dma.hbm_to_vmem [thread:$0]  %s3, 128, %s54, [#allocation9]
    $region17: #{tpu_custom_call.1} parent=1 // pred_fallthru
      _
    // Predicated region
    $region18: #{tpu_custom_call.1} parent=1 // pred_check
      _
    $region19: #{tpu_custom_call.1} parent=1 // pred_check_branch
      %58 = sbr.rel (0) target = $region21
    $region20: #{tpu_custom_call.1} parent=1 // pred_region
      %s60 = ssub.s32 2048, 2048
      %61 = vsyncadd [#allocation9], %s60
      %s62 = sshll.u32 [#allocation10], 4
      %s63 = int_to_ptr.vmem [resolvable:$true] %s62
      %68 = dma.hbm_to_vmem [thread:$0]  %s4, 2048, %s63, [#allocation9], 128, 128, 8
    $region21: #{tpu_custom_call.1} parent=1 // pred_fallthru
      _
    // Predicated region
    $region22: #{tpu_custom_call.1} parent=1 // pred_check
      _
    $region23: #{tpu_custom_call.1} parent=1 // pred_check_branch
      %70 = sbr.rel (0) target = $region25
    $region24: #{tpu_custom_call.1} parent=1 // pred_region
      _
    $region25: #{tpu_custom_call.1} parent=1 // pred_fallthru
      _
    // Predicated region
    $region26: #{tpu_custom_call.1} parent=1 // pred_check
      _
    $region27: #{tpu_custom_call.1} parent=1 // pred_check_branch
      %72 = sbr.rel (0) target = $region29
    $region28: #{tpu_custom_call.1} parent=1 // pred_region
      %73 = dma.done [#allocation3], 128
    $region29: #{tpu_custom_call.1} parent=1 // pred_fallthru
      _
    // Predicated region
    $region30: #{tpu_custom_call.1} parent=1 // pred_check
      _
    $region31: #{tpu_custom_call.1} parent=1 // pred_check_branch
      %75 = sbr.rel (0) target = $region33
    $region32: #{tpu_custom_call.1} parent=1 // pred_region
      %76 = dma.done [#allocation6], 128
    $region33: #{tpu_custom_call.1} parent=1 // pred_fallthru
      _
    // Predicated region
    $region34: #{tpu_custom_call.1} parent=1 // pred_check
      _
    $region35: #{tpu_custom_call.1} parent=1 // pred_check_branch
      %78 = sbr.rel (0) target = $region37
    $region36: #{tpu_custom_call.1} parent=1 // pred_region
      %79 = dma.done [#allocation6], 512
    $region37: #{tpu_custom_call.1} parent=1 // pred_fallthru
      _
    // Predicated region
    $region38: #{tpu_custom_call.1} parent=1 // pred_check
      _
    $region39: #{tpu_custom_call.1} parent=1 // pred_check_branch
      %81 = sbr.rel (0) target = $region41
    $region40: #{tpu_custom_call.1} parent=1 // pred_region
      %82 = dma.done [#allocation9], 128
    $region41: #{tpu_custom_call.1} parent=1 // pred_fallthru
      _
    // Predicated region
    $region42: #{tpu_custom_call.1} parent=1 // pred_check
      _
    $region43: #{tpu_custom_call.1} parent=1 // pred_check_branch
      %84 = sbr.rel (0) target = $region45
    $region44: #{tpu_custom_call.1} parent=1 // pred_region
      %85 = dma.done [#allocation9], 2048
    $region45: #{tpu_custom_call.1} parent=1 // pred_fallthru
      _
    %v86 = vld [vmem:[#allocation2] sm:$0xff]
    %v87 = vld [vmem:[#allocation5] sm:$0xff]
    %v88 = vld [vmem:[%s5] sm:$0xff]
    %v89 = vld [vmem:[#allocation7] sm:$0xff]
    %v90 = vld [vmem:[#allocation7 + $0x8] sm:$0xff]
    %v91 = vld [vmem:[#allocation7 + $0x10] sm:$0xff]
    %v92 = vld [vmem:[#allocation7 + $0x18] sm:$0xff]
    %v93 = vld [vmem:[#allocation8] sm:$0xff]
    %vm94 = vcmask 64512
    %v96 = vsel %vm94, %v87, 0
    %98 = vmatprep.subr.mxu0 0.0
    %99 = vmatpush1.msra.mxu0 0.0
    %100 = vmatprep.subr.mxu0 0.0
    %101 = vmatpush1.msra.mxu0 0.0
    %102 = vmatprep.subr.mxu0 0.0
    %103 = vmatpush1.msra.mxu0 0.0
    %104 = vmatprep.subr.mxu0 0.0
    %105 = vmatpush1.msra.mxu0 0.0
    %106 = vmatprep.subr.mxu0 0.0
    %107 = vmatpush1.msra.mxu0 0.0
    %108 = vmatprep.subr.mxu0 0.0
    %109 = vmatpush1.msra.mxu0 0.0
    %110 = vmatprep.subr.mxu0 0.0
    %111 = vmatpush1.msra.mxu0 0.0
    %112 = vmatprep.subr.mxu0 0.0
    %113 = vmatpush1.msra.mxu0 0.0
    %114 = vmatprep.subr.mxu0 0.0
    %115 = vmatpush1.msra.mxu0 0.0
    %116 = vmatprep.subr.mxu0 0.0
    %117 = vmatpush1.msra.mxu0 0.0
    %118 = vmatprep.subr.mxu0 0.0
    %119 = vmatpush1.msra.mxu0 0.0
    %120 = vmatprep.subr.mxu0 0.0
    %121 = vmatpush1.msra.mxu0 0.0
    %122 = vmatprep.subr.mxu0 0.0
    %123 = vmatpush1.msra.mxu0 0.0
    %124 = vmatprep.subr.mxu0 0.0
    %125 = vmatpush1.msra.mxu0 0.0
    %126 = vmatprep.subr.mxu0 0.0
    %127 = vmatpush1.msra.mxu0 0.0
    %128 = vmatprep.subr.mxu0 0.0
    %129 = vmatpush1.msra.mxu0 %v93
    %130 = vmatprep.subr.mxu0 0.0
    %131 = vmatpush2.msra.mxu0 0.0
    %132 = vmatprep.subr.mxu0 0.0
    %133 = vmatpush2.msra.mxu0 0.0
    %134 = vmatprep.subr.mxu0 0.0
    %135 = vmatpush2.msra.mxu0 0.0
    %136 = vmatprep.subr.mxu0 0.0
    %137 = vmatpush2.msra.mxu0 0.0
    %138 = vmatprep.subr.mxu0 0.0
    %139 = vmatpush2.msra.mxu0 0.0
    %140 = vmatprep.subr.mxu0 0.0
    %141 = vmatpush2.msra.mxu0 0.0
    %142 = vmatprep.subr.mxu0 0.0
    %143 = vmatpush2.msra.mxu0 0.0
    %144 = vmatprep.subr.mxu0 0.0
    %145 = vmatpush2.msra.mxu0 0.0
    %146 = vmatprep.subr.mxu0 0.0
    %147 = vmatpush2.msra.mxu0 0.0
    %148 = vmatprep.subr.mxu0 0.0
    %149 = vmatpush2.msra.mxu0 0.0
    %150 = vmatprep.subr.mxu0 0.0
    %151 = vmatpush2.msra.mxu0 0.0
    %152 = vmatprep.subr.mxu0 0.0
    %153 = vmatpush2.msra.mxu0 0.0
    %154 = vmatprep.subr.mxu0 0.0
    %155 = vmatpush2.msra.mxu0 0.0
    %156 = vmatprep.subr.mxu0 0.0
    %157 = vmatpush2.msra.mxu0 0.0
    %158 = vmatprep.subr.mxu0 0.0
    %159 = vmatpush2.msra.mxu0 0.0
    %160 = vmatprep.subr.mxu0 0.0
    %161 = vmatpush2.msra.mxu0 0.0
    %162 = vmatprep.mubr.f32.mxu0 0.0
    %163 = vmatmul.mubr.f32.gmra.mxu0 %v96
    %v164 = vpop.f32.mrf.mxu0
    %v165 = vadd.f32 0.0, %v164
    %v166 = vpop.f32.mrf.mxu0
    %167 = vdwg.mxu0
    %vm168 = vcmask 261120
    %v170 = vsel %vm168, %v86, 0
    %172 = vmatprep.subr.mxu0 0.0
    %173 = vmatpush1.msra.mxu0 0.0
    %174 = vmatprep.subr.mxu0 0.0
    %175 = vmatpush1.msra.mxu0 0.0
    %176 = vmatprep.subr.mxu0 0.0
    %177 = vmatpush1.msra.mxu0 0.0
    %178 = vmatprep.subr.mxu0 0.0
    %179 = vmatpush1.msra.mxu0 0.0
    %180 = vmatprep.subr.mxu0 0.0
    %181 = vmatpush1.msra.mxu0 0.0
    %182 = vmatprep.subr.mxu0 0.0
    %183 = vmatpush1.msra.mxu0 0.0
    %184 = vmatprep.subr.mxu0 0.0
    %185 = vmatpush1.msra.mxu0 0.0
    %186 = vmatprep.subr.mxu0 0.0
    %187 = vmatpush1.msra.mxu0 0.0
    %188 = vmatprep.subr.mxu0 0.0
    %189 = vmatpush1.msra.mxu0 0.0
    %190 = vmatprep.subr.mxu0 0.0
    %191 = vmatpush1.msra.mxu0 0.0
    %192 = vmatprep.subr.mxu0 0.0
    %193 = vmatpush1.msra.mxu0 0.0
    %194 = vmatprep.subr.mxu0 0.0
    %195 = vmatpush1.msra.mxu0 0.0
    %196 = vmatprep.subr.mxu0 0.0
    %197 = vmatpush1.msra.mxu0 %v92
    %198 = vmatprep.subr.mxu0 0.0
    %199 = vmatpush1.msra.mxu0 %v91
    %200 = vmatprep.subr.mxu0 0.0
    %201 = vmatpush1.msra.mxu0 %v90
    %202 = vmatprep.subr.mxu0 0.0
    %203 = vmatpush1.msra.mxu0 %v89
    %204 = vmatprep.subr.mxu0 0.0
    %205 = vmatpush2.msra.mxu0 0.0
    %206 = vmatprep.subr.mxu0 0.0
    %207 = vmatpush2.msra.mxu0 0.0
    %208 = vmatprep.subr.mxu0 0.0
    %209 = vmatpush2.msra.mxu0 0.0
    %210 = vmatprep.subr.mxu0 0.0
    %211 = vmatpush2.msra.mxu0 0.0
    %212 = vmatprep.subr.mxu0 0.0
    %213 = vmatpush2.msra.mxu0 0.0
    %214 = vmatprep.subr.mxu0 0.0
    %215 = vmatpush2.msra.mxu0 0.0
    %216 = vmatprep.subr.mxu0 0.0
    %217 = vmatpush2.msra.mxu0 0.0
    %218 = vmatprep.subr.mxu0 0.0
    %219 = vmatpush2.msra.mxu0 0.0
    %220 = vmatprep.subr.mxu0 0.0
    %221 = vmatpush2.msra.mxu0 0.0
    %222 = vmatprep.subr.mxu0 0.0
    %223 = vmatpush2.msra.mxu0 0.0
    %224 = vmatprep.subr.mxu0 0.0
    %225 = vmatpush2.msra.mxu0 0.0
    %226 = vmatprep.subr.mxu0 0.0
    %227 = vmatpush2.msra.mxu0 0.0
    %228 = vmatprep.subr.mxu0 0.0
    %229 = vmatpush2.msra.mxu0 0.0
    %230 = vmatprep.subr.mxu0 0.0
    %231 = vmatpush2.msra.mxu0 0.0
    %232 = vmatprep.subr.mxu0 0.0
    %233 = vmatpush2.msra.mxu0 0.0
    %234 = vmatprep.subr.mxu0 0.0
    %235 = vmatpush2.msra.mxu0 0.0
    %236 = vmatprep.mubr.f32.mxu0 0.0
    %237 = vmatmul.mubr.f32.gmra.mxu0 %v170
    %v238 = vpop.f32.mrf.mxu0
    %v239 = vadd.f32 %v165, %v238
    %v240 = vpop.f32.mrf.mxu0
    %241 = vdwg.mxu0
    %v242 = vrot.slane %v239, 4
    %v243 = vadd.f32 %v239, %v242
    %v244 = vrot.slane %v243, 2
    %v245 = vadd.f32 %v243, %v244
    %v246 = vrot.slane %v245, 1
    %v247 = vadd.f32 %v245, %v246
    %v248 = vmul.f32 %v247, 0.125
    %v249 = vmul.f32 %v239, %v239
    %v250 = vrot.slane %v249, 4
    %v251 = vadd.f32 %v249, %v250
    %v252 = vrot.slane %v251, 2
    %v253 = vadd.f32 %v251, %v252
    %v254 = vrot.slane %v253, 1
    %v255 = vadd.f32 %v253, %v254
    %v256 = vmul.f32 %v255, 0.125
    %v257 = vmul.f32 %v248, %v248
    %v258 = vsub.f32 %v256, %v257
    %v259 = vadd.f32 %v258, 1e-05
    %v260 = vrsqrt.pop %v259
    %v261 = vmul.f32 %v88, %v260
    %v262 = vmul.f32 %v248, %v261
    %v264 = vrot.slane %v262, 7
    %v266 = vsub.f32 %v88, %v264
    %v267 = vlaneseq
    %v268 = vshrl.u32 %v267, 7
    %v269 = vsub.s32 0, %v268
    %v270 = vrot.slane %v261, %v269
    %v271 = vmul.f32 %v239, %v270
    %v272 = vlaneseq
    %v273 = vshrl.u32 %v272, 7
    %v274 = vsub.s32 1, %v273
    %v275 = vrot.slane %v266, %v274
    %v276 = vadd.f32 %v271, %v275
    %v277 = vmax.f32 %v276, 0.0
    %v278 = vld [vmem:[#allocation10] sm:$0xff]
    %v279 = vld [vmem:[#allocation10 + $0x8] sm:$0xff]
    %v280 = vld [vmem:[#allocation10 + $0x10] sm:$0xff]
    %v281 = vld [vmem:[#allocation10 + $0x18] sm:$0xff]
    %v282 = vld [vmem:[#allocation10 + $0x20] sm:$0xff]
    %v283 = vld [vmem:[#allocation10 + $0x28] sm:$0xff]
    %v284 = vld [vmem:[#allocation10 + $0x30] sm:$0xff]
    %v285 = vld [vmem:[#allocation10 + $0x38] sm:$0xff]
    %v286 = vld [vmem:[#allocation10 + $0x40] sm:$0xff]
    %v287 = vld [vmem:[#allocation10 + $0x48] sm:$0xff]
    %v288 = vld [vmem:[#allocation10 + $0x50] sm:$0xff]
    %v289 = vld [vmem:[#allocation10 + $0x58] sm:$0xff]
    %v290 = vld [vmem:[#allocation10 + $0x60] sm:$0xff]
    %v291 = vld [vmem:[#allocation10 + $0x68] sm:$0xff]
    %v292 = vld [vmem:[#allocation10 + $0x70] sm:$0xff]
    %v293 = vld [vmem:[#allocation10 + $0x78] sm:$0xff]
    %294 = vmatprep.subr.mxu0 0.0
    %295 = vmatpush1.msra.mxu0 %v293
    %296 = vmatprep.subr.mxu0 0.0
    %297 = vmatpush1.msra.mxu0 %v292
    %298 = vmatprep.subr.mxu0 0.0
    %299 = vmatpush1.msra.mxu0 %v291
    %300 = vmatprep.subr.mxu0 0.0
    %301 = vmatpush1.msra.mxu0 %v290
    %302 = vmatprep.subr.mxu0 0.0
    %303 = vmatpush1.msra.mxu0 %v289
    %304 = vmatprep.subr.mxu0 0.0
    %305 = vmatpush1.msra.mxu0 %v288
    %306 = vmatprep.subr.mxu0 0.0
    %307 = vmatpush1.msra.mxu0 %v287
    %308 = vmatprep.subr.mxu0 0.0
    %309 = vmatpush1.msra.mxu0 %v286
    %310 = vmatprep.subr.mxu0 0.0
    %311 = vmatpush1.msra.mxu0 %v285
    %312 = vmatprep.subr.mxu0 0.0
    %313 = vmatpush1.msra.mxu0 %v284
    %314 = vmatprep.subr.mxu0 0.0
    %315 = vmatpush1.msra.mxu0 %v283
    %316 = vmatprep.subr.mxu0 0.0
    %317 = vmatpush1.msra.mxu0 %v282
    %318 = vmatprep.subr.mxu0 0.0
    %319 = vmatpush1.msra.mxu0 %v281
    %320 = vmatprep.subr.mxu0 0.0
    %321 = vmatpush1.msra.mxu0 %v280
    %322 = vmatprep.subr.mxu0 0.0
    %323 = vmatpush1.msra.mxu0 %v279
    %324 = vmatprep.subr.mxu0 0.0
    %325 = vmatpush1.msra.mxu0 %v278
    %326 = vmatprep.subr.mxu0 0.0
    %327 = vmatpush2.msra.mxu0 0.0
    %328 = vmatprep.subr.mxu0 0.0
    %329 = vmatpush2.msra.mxu0 0.0
    %330 = vmatprep.subr.mxu0 0.0
    %331 = vmatpush2.msra.mxu0 0.0
    %332 = vmatprep.subr.mxu0 0.0
    %333 = vmatpush2.msra.mxu0 0.0
    %334 = vmatprep.subr.mxu0 0.0
    %335 = vmatpush2.msra.mxu0 0.0
    %336 = vmatprep.subr.mxu0 0.0
    %337 = vmatpush2.msra.mxu0 0.0
    %338 = vmatprep.subr.mxu0 0.0
    %339 = vmatpush2.msra.mxu0 0.0
    %340 = vmatprep.subr.mxu0 0.0
    %341 = vmatpush2.msra.mxu0 0.0
    %342 = vmatprep.subr.mxu0 0.0
    %343 = vmatpush2.msra.mxu0 0.0
    %344 = vmatprep.subr.mxu0 0.0
    %345 = vmatpush2.msra.mxu0 0.0
    %346 = vmatprep.subr.mxu0 0.0
    %347 = vmatpush2.msra.mxu0 0.0
    %348 = vmatprep.subr.mxu0 0.0
    %349 = vmatpush2.msra.mxu0 0.0
    %350 = vmatprep.subr.mxu0 0.0
    %351 = vmatpush2.msra.mxu0 0.0
    %352 = vmatprep.subr.mxu0 0.0
    %353 = vmatpush2.msra.mxu0 0.0
    %354 = vmatprep.subr.mxu0 0.0
    %355 = vmatpush2.msra.mxu0 0.0
    %356 = vmatprep.subr.mxu0 0.0
    %357 = vmatpush2.msra.mxu0 0.0
    %358 = vmatprep.mubr.f32.mxu0 0.0
    %359 = vmatmul.mubr.f32.gmra.mxu0 %v277
    %v360 = vpop.f32.mrf.mxu0
    %v361 = vadd.f32 0.0, %v360
    %v362 = vpop.f32.mrf.mxu0
    %363 = vdwg.mxu0
    %v364 = vrot.slane %v361, 4
    %v365 = vadd.f32 %v361, %v364
    %v366 = vrot.slane %v365, 2
    %v367 = vadd.f32 %v365, %v366
    %v368 = vrot.slane %v367, 1
    %v369 = vadd.f32 %v367, %v368
    %v370 = vmul.f32 %v369, 0.125
    %v371 = vmul.f32 %v361, %v361
    %v372 = vrot.slane %v371, 4
    %v373 = vadd.f32 %v371, %v372
    %v374 = vrot.slane %v373, 2
    %v375 = vadd.f32 %v373, %v374
    %v376 = vrot.slane %v375, 1
    %v377 = vadd.f32 %v375, %v376
    %v378 = vmul.f32 %v377, 0.125
    %v379 = vmul.f32 %v370, %v370
    %v380 = vsub.f32 %v378, %v379
    %v381 = vadd.f32 %v380, 1e-05
    %v382 = vrsqrt.pop %v381
    %v383 = vmul.f32 %v88, %v382
    %v384 = vmul.f32 %v370, %v383
    %v386 = vrot.slane %v384, 7
    %v388 = vsub.f32 %v88, %v386
    %v389 = vlaneseq
    %v390 = vshrl.u32 %v389, 7
    %v391 = vsub.s32 2, %v390
    %v392 = vrot.slane %v383, %v391
    %v393 = vmul.f32 %v361, %v392
    %v394 = vlaneseq
    %v395 = vshrl.u32 %v394, 7
    %v396 = vsub.s32 3, %v395
    %v397 = vrot.slane %v388, %v396
    %v398 = vadd.f32 %v393, %v397
    %v399 = vmax.f32 %v398, 0.0
    %400 = vst [vmem:[#allocation11] sm:$0xff] %v399
    // Predicated region
    $region46: #{tpu_custom_call.1} parent=1 // pred_check
      _
    $region47: #{tpu_custom_call.1} parent=1 // pred_check_branch
      %402 = sbr.rel (0) target = $region49
    $region48: #{tpu_custom_call.1} parent=1 // pred_region
      %s404 = ssub.s32 128, 128
      %405 = vsyncadd [#allocation4], %s404
      %s407 = sshll.u32 [#allocation11], 4
      %s408 = int_to_ptr.vmem [resolvable:$true] %s407
      %410 = dma.vmem_to_hbm [thread:$0]  %s408, 128, %s6, [#allocation4]
    $region49: #{tpu_custom_call.1} parent=1 // pred_fallthru
      _
    // Predicated region
    $region50: #{tpu_custom_call.1} parent=1 // pred_check
      _
    $region51: #{tpu_custom_call.1} parent=1 // pred_check_branch
      %412 = sbr.rel (0) target = $region53
    $region52: #{tpu_custom_call.1} parent=1 // pred_region
      %413 = dma.done [#allocation4], 128
    $region53: #{tpu_custom_call.1} parent=1 // pred_fallthru
      _
    %414 = vsyncpa [#allocation3], 1
    %415 = vsyncpa [#allocation6], 1
    %416 = vsyncpa [#allocation9], 1
    %417 = vsyncpa [#allocation4], 1

</llo_original>
